<compile_context>
chip_gen: v6e
topology: v6e:2x2x1
jax: 0.10.0
libtpu: 0.0.40
codegen_flags: <defaults>
</compile_context>

<pallas_src>
import functools

import jax
import jax.numpy as jnp
from jax import lax
from jax.experimental import pallas as pl
from jax.experimental.pallas import tpu as pltpu


def _dis_kernel(ys_ref, yt_ref, out_ref, *, row_tile):
    """One grid step: KL + self-attention-MSE partial sums for `row_tile` rows."""
    i = pl.program_id(0)
    row0 = pl.multiple_of(i * row_tile, row_tile)

    # Full operands are VMEM-resident across the grid (constant index_map);
    # only the query-row slab changes per step.
    ys_full = ys_ref[...]                               # (B, D), input dtype
    yt_full = yt_ref[...]
    ys_q = ys_ref[pl.ds(row0, row_tile), :]             # (TB, D)
    yt_q = yt_ref[pl.ds(row0, row_tile), :]

    # ---- KL partial: sum over this row tile of y_t*(log y_t - y_s); xlogy(0,.)=0.
    yt32 = yt_q.astype(jnp.float32)
    ys32 = ys_q.astype(jnp.float32)
    tiny = jnp.float32(jnp.finfo(jnp.float32).tiny)
    kl_elem = jnp.where(
        yt32 > 0.0,
        yt32 * (jnp.log(jnp.maximum(yt32, tiny)) - ys32),
        0.0,
    )
    kl_part = jnp.sum(kl_elem)

    # ---- Both self-attention maps in one batched MXU pass (n = {student, teacher}).
    q2 = jnp.stack([ys_q, yt_q])                        # (2, TB, D)
    v2 = jnp.stack([ys_full, yt_full])                  # (2, B,  D)
    # scores = q @ v^T without materializing a transpose: contract the lane (D)
    # axis of both operands, batched over n.
    scores = lax.dot_general(
        q2, v2,
        dimension_numbers=(((2,), (2,)), ((0,), (0,))),
        preferred_element_type=jnp.float32,
    )                                                   # (2, TB, B), f32
    m = jnp.max(scores, axis=-1, keepdims=True)
    e = jnp.exp(scores - m)
    denom = jnp.sum(e, axis=-1, keepdims=True)
    # Exact reciprocal: approx=True (EUP vrcp) was evaluated but its error gets
    # amplified through the squared SA difference past the 1e-5-level tolerance.
    w = e * pl.reciprocal(denom)
    sa = lax.dot_general(
        w.astype(v2.dtype), v2,                         # bf16 inputs feed the MXU as bf16
        dimension_numbers=(((2,), (1,)), ((0,), (0,))),
        preferred_element_type=jnp.float32,
    )                                                   # (2, TB, D), f32
    diff = sa[0] - sa[1]
    mse_part = jnp.sum(diff * diff)

    # Un-normalized per-tile partial; wrapper applies the single 1/(B*D) scale.
    out_ref[0, 0] = kl_part + mse_part


def _pick_row_tile(b):
    """Largest convenient row tile dividing B; caps the (row_tile, B) score slab."""
    for tb in (512, 256, 128, 64, 32, 16, 8):
        if b % tb == 0 and 2 * tb * b * 4 <= (16 << 20):
            return tb
    return b  # small / awkward B: single tile


def dis_loss(y_s, y_t):
    """Pallas implementation of Dis(T).forward(y_s, y_t). Returns a scalar."""
    assert y_s.shape == y_t.shape and y_s.ndim == 2
    B, D = y_s.shape
    row_tile = _pick_row_tile(B)
    num_tiles = B // row_tile

    itemsize = jnp.dtype(y_s.dtype).itemsize
    # Rough VMEM bound: resident inputs (+ stacked copy) + score/exp/weight slabs
    # + SA outputs; x2 headroom for temporaries / buffering.
    vmem_est = 2 * (2 * B * D * (itemsize + 4)
                    + 4 * row_tile * B * 4
                    + 8 * row_tile * D * 4) + (1 << 20)
    vmem_limit = int(max(32 << 20, min(vmem_est, 96 << 20)))
    # TODO(synk): for B*D too large to keep both full inputs VMEM-resident
    # (notably v7x's 64 MiB), a flash-style online softmax over key-column
    # tiles is required; not implemented here.

    cost = pl.CostEstimate(
        flops=8 * B * B * D + 12 * B * D,      # 2 maps x 2 matmuls + elementwise
        transcendentals=2 * B * B,             # exp in both softmaxes
        bytes_accessed=2 * B * D * itemsize + num_tiles * 4,
    )

    partials = pl.pallas_call(
        functools.partial(_dis_kernel, row_tile=row_tile),
        out_shape=jax.ShapeDtypeStruct((num_tiles, 1), jnp.float32),
        grid_spec=pltpu.PrefetchScalarGridSpec(
            num_scalar_prefetch=0,
            grid=(num_tiles,),
            in_specs=[
                pl.BlockSpec((B, D), lambda i: (0, 0)),   # resident across grid
                pl.BlockSpec((B, D), lambda i: (0, 0)),
            ],
            out_specs=pl.BlockSpec((1, 1), lambda i: (i, 0),
                                   memory_space=pltpu.MemorySpace.SMEM),
        ),
        compiler_params=pltpu.CompilerParams(
            dimension_semantics=("parallel",),   # row-tile axis -> both TCs on v7x
            vmem_limit_bytes=vmem_limit,
        ),
        cost_estimate=cost,
    )(y_s, y_t)

    # Single hoisted normalization: both KL 'mean' and MSE 'mean' divide by B*D.
    return jnp.sum(partials) * jnp.float32(1.0 / (B * D))


def _dis_loss_ref(y_s, y_t):
    """Pure-JAX reference for sanity checking."""
    y_s = y_s.astype(jnp.float32)
    y_t = y_t.astype(jnp.float32)
    kl = jnp.mean(jnp.where(y_t > 0,
                            y_t * (jnp.log(jnp.where(y_t > 0, y_t, 1.0)) - y_s),
                            0.0))

    def sa(y):
        s = y @ y.T
        w = jax.nn.softmax(s, axis=-1)
        return w @ y

    diff = sa(y_s) - sa(y_t)
    mse = jnp.mean(diff * diff)
    return kl + mse


def _make_inputs(key, b, d):
    k_s, k_t = jax.random.split(key)
    logits_s = jax.random.normal(k_s, (b, d), dtype=jnp.float32)
    logits_t = jax.random.normal(k_t, (b, d), dtype=jnp.float32)
    y_s = jax.nn.log_softmax(logits_s, axis=-1)   # F.kl_div input: log-probs
    y_t = jax.nn.softmax(logits_t, axis=-1)       # F.kl_div target: probs
    return y_s, y_t


if __name__ == "__main__":
    key = jax.random.PRNGKey(0)

    # Primary small demo: batch=8, classes=32 (single-tile grid).
    y_s, y_t = _make_inputs(key, 8, 32)
    loss = jax.block_until_ready(dis_loss(y_s, y_t))
    ref = jax.block_until_ready(_dis_loss_ref(y_s, y_t))
    assert jnp.isfinite(loss), "kernel produced non-finite loss"
    assert jnp.allclose(loss, ref, rtol=1e-5, atol=1e-4), (loss, ref)

    # Second small check that exercises the multi-tile parallel grid (3 row tiles).
    y_s2, y_t2 = _make_inputs(jax.random.PRNGKey(1), 24, 32)
    loss2 = jax.block_until_ready(dis_loss(y_s2, y_t2))
    ref2 = jax.block_until_ready(_dis_loss_ref(y_s2, y_t2))
    assert jnp.isfinite(loss2), "kernel produced non-finite loss (tiled case)"
    assert jnp.allclose(loss2, ref2, rtol=1e-5, atol=1e-4), (loss2, ref2)

    print("KERNEL_OK")
</pallas_src>

<mosaic_0001>
module attributes {stable_mosaic.version = 11 : i64} {
  func.func @_dis_kernel(%arg0: i32, %arg1: memref<8x32xf32, #tpu.memory_space<vmem>>, %arg2: memref<8x32xf32, #tpu.memory_space<vmem>>, %arg3: memref<1x1xf32, #tpu.memory_space<smem>>) attributes {dimension_semantics = [#tpu.dimension_semantics<parallel>], iteration_bounds = array<i64: 1>, scalar_prefetch = 0 : i64, scratch_operands = 0 : i64, tpu.core_type = #tpu.core_type<tc>, window_params = [{pipeline_mode = #tpu.pipeline_mode<synchronous>, transform_indices = @transform_0, window_bounds = array<i64: 8, 32>}, {pipeline_mode = #tpu.pipeline_mode<synchronous>, transform_indices = @transform_1, window_bounds = array<i64: 8, 32>}, {transform_indices = @transform_2, window_bounds = array<i64: 1, 1>}]} {
    %c8_i32 = arith.constant 8 : i32
    %0 = arith.muli %arg0, %c8_i32 : i32
    %1 = tpu.assume_multiple %0, 8 : i32
    %c0 = arith.constant 0 : index
    %c0_0 = arith.constant 0 : index
    %2 = vector.load %arg1[%c0, %c0_0] : memref<8x32xf32, #tpu.memory_space<vmem>>, vector<8x32xf32>
    %c0_1 = arith.constant 0 : index
    %c0_2 = arith.constant 0 : index
    %3 = vector.load %arg2[%c0_1, %c0_2] : memref<8x32xf32, #tpu.memory_space<vmem>>, vector<8x32xf32>
    %4 = arith.index_cast %1 : i32 to index
    %c0_3 = arith.constant 0 : index
    %5 = vector.load %arg1[%4, %c0_3] : memref<8x32xf32, #tpu.memory_space<vmem>>, vector<8x32xf32>
    %6 = arith.index_cast %1 : i32 to index
    %c0_4 = arith.constant 0 : index
    %7 = vector.load %arg2[%6, %c0_4] : memref<8x32xf32, #tpu.memory_space<vmem>>, vector<8x32xf32>
    %cst = arith.constant 0.000000e+00 : f32
    %8 = vector.broadcast %cst : f32 to vector<8x32xf32>
    %9 = arith.cmpf ogt, %7, %8 : vector<8x32xf32>
    %cst_5 = arith.constant 1.17549435E-38 : f32
    %10 = vector.broadcast %cst_5 : f32 to vector<8x32xf32>
    %11 = arith.maximumf %7, %10 : vector<8x32xf32>
    %12 = math.log %11 : vector<8x32xf32>
    %13 = arith.subf %12, %5 : vector<8x32xf32>
    %14 = arith.mulf %7, %13 : vector<8x32xf32>
    %cst_6 = arith.constant 0.000000e+00 : f32
    %15 = vector.broadcast %cst_6 : f32 to vector<8x32xf32>
    %16 = arith.select %9, %14, %15 : vector<8x32xi1>, vector<8x32xf32>
    %17 = vector.shape_cast %16 : vector<8x32xf32> to vector<1x8x32xf32>
    %cst_7 = arith.constant dense<0.000000e+00> : vector<1xf32>
    %18 = vector.multi_reduction <add>, %17, %cst_7 [1, 2] : vector<1x8x32xf32> to vector<1xf32>
    %19 = vector.shape_cast %18 : vector<1xf32> to vector<1x1x1xf32>
    %20 = vector.extract %19[0, 0, 0] : f32 from vector<1x1x1xf32>
    %21 = vector.shape_cast %5 : vector<8x32xf32> to vector<1x8x32xf32>
    %22 = vector.shape_cast %7 : vector<8x32xf32> to vector<1x8x32xf32>
    %23 = tpu.concatenate %21, %22 in 0 : vector<1x8x32xf32>, vector<1x8x32xf32> -> vector<2x8x32xf32>
    %24 = vector.shape_cast %2 : vector<8x32xf32> to vector<1x8x32xf32>
    %25 = vector.shape_cast %3 : vector<8x32xf32> to vector<1x8x32xf32>
    %26 = tpu.concatenate %24, %25 in 0 : vector<1x8x32xf32>, vector<1x8x32xf32> -> vector<2x8x32xf32>
    %cst_8 = arith.constant dense<0.000000e+00> : vector<2x8x8xf32>
    %27 = tpu.matmul %23, %26, %cst_8 {dimension_numbers = #tpu.dot_dimension_numbers<[2], [2], [1], [1], [0, 0, 0, 1, 1, 1], [0], [0]>} : vector<2x8x32xf32>, vector<2x8x32xf32>, vector<2x8x8xf32> -> vector<2x8x8xf32>
    %cst_9 = arith.constant dense<0xFF800000> : vector<2x8xf32>
    %28 = vector.multi_reduction <maximumf>, %27, %cst_9 [2] : vector<2x8x8xf32> to vector<2x8xf32>
    %29 = vector.shape_cast %28 : vector<2x8xf32> to vector<2x8x1xf32>
    %30 = vector.broadcast %29 : vector<2x8x1xf32> to vector<2x8x8xf32>
    %31 = arith.subf %27, %30 : vector<2x8x8xf32>
    %32 = math.exp %31 : vector<2x8x8xf32>
    %cst_10 = arith.constant dense<0.000000e+00> : vector<2x8xf32>
    %33 = vector.multi_reduction <add>, %32, %cst_10 [2] : vector<2x8x8xf32> to vector<2x8xf32>
    %34 = vector.shape_cast %33 : vector<2x8xf32> to vector<2x8x1xf32>
    %35 = tpu.reciprocal %34 : vector<2x8x1xf32> -> vector<2x8x1xf32>
    %36 = vector.broadcast %35 : vector<2x8x1xf32> to vector<2x8x8xf32>
    %37 = arith.mulf %32, %36 : vector<2x8x8xf32>
    %cst_11 = arith.constant dense<0.000000e+00> : vector<2x8x32xf32>
    %38 = tpu.matmul %37, %26, %cst_11 {dimension_numbers = #tpu.dot_dimension_numbers<[2], [1], [1], [2], [0, 0, 0, 1, 1, 2], [0], [0]>} : vector<2x8x8xf32>, vector<2x8x32xf32>, vector<2x8x32xf32> -> vector<2x8x32xf32>
    %39 = vector.extract_strided_slice %38 {offsets = [0, 0, 0], sizes = [1, 8, 32], strides = [1, 1, 1]} : vector<2x8x32xf32> to vector<1x8x32xf32>
    %40 = vector.shape_cast %39 : vector<1x8x32xf32> to vector<8x32xf32>
    %41 = vector.extract_strided_slice %38 {offsets = [1, 0, 0], sizes = [1, 8, 32], strides = [1, 1, 1]} : vector<2x8x32xf32> to vector<1x8x32xf32>
    %42 = vector.shape_cast %41 : vector<1x8x32xf32> to vector<8x32xf32>
    %43 = arith.subf %40, %42 : vector<8x32xf32>
    %44 = arith.mulf %43, %43 : vector<8x32xf32>
    %45 = vector.shape_cast %44 : vector<8x32xf32> to vector<1x8x32xf32>
    %cst_12 = arith.constant dense<0.000000e+00> : vector<1xf32>
    %46 = vector.multi_reduction <add>, %45, %cst_12 [1, 2] : vector<1x8x32xf32> to vector<1xf32>
    %47 = vector.shape_cast %46 : vector<1xf32> to vector<1x1x1xf32>
    %48 = vector.extract %47[0, 0, 0] : f32 from vector<1x1x1xf32>
    %49 = arith.addf %20, %48 : f32
    %c0_13 = arith.constant 0 : index
    %c0_14 = arith.constant 0 : index
    %50 = memref.load %arg3[%c0_13, %c0_14] : memref<1x1xf32, #tpu.memory_space<smem>>
    memref.store %49, %arg3[%c0_13, %c0_14] : memref<1x1xf32, #tpu.memory_space<smem>>
    return
  }
  func.func @transform_0(%arg0: i32) -> (i32, i32) {
    %c0_i32 = arith.constant 0 : i32
    %c0_i32_0 = arith.constant 0 : i32
    %c0_i32_1 = arith.constant 0 : i32
    return %c0_i32, %c0_i32_0 : i32, i32
  }
  func.func @transform_1(%arg0: i32) -> (i32, i32) {
    %c0_i32 = arith.constant 0 : i32
    %c0_i32_0 = arith.constant 0 : i32
    %c0_i32_1 = arith.constant 0 : i32
    return %c0_i32, %c0_i32_0 : i32, i32
  }
  func.func @transform_2(%arg0: i32) -> (i32, i32) {
    %c0_i32 = arith.constant 0 : i32
    %c0_i32_0 = arith.constant 0 : i32
    return %arg0, %c0_i32 : i32, i32
  }
}

</mosaic_0001>

<llo_original>
// kernel: tpu_custom_call.1
$region0: #{tpu_custom_call.1}
  #allocation0 [shape = 'u32[]', space=smem, size = 0x4, offset = 0x4, fixed_abs, tag = 'smem constant byte address 0x4 - core index']
  #allocation1 [shape = 'u32[144,128]{1,0:T(1,128)}', space=vmem, size = 0x12000, scoped, tag = 'internal scratch']
  %s0 = inlined_call_operand.hbm [shape: f32[8,32], index: 0, kind: input, shape index: {}]
  %s1 = inlined_call_operand.hbm [shape: f32[8,32], index: 1, kind: input, shape index: {}]
  %s2 = inlined_call_operand.hbm [shape: f32[1,1], index: 2, kind: output, shape index: {}]
  %s3 = sld [smem:[#allocation0]]
  $region26: #{tpu_custom_call.1} parent=0
    _
  %s5 = ssub.s32 1, %s3
  %s6 = scalar_select 0, %s5, %s3
  $region1: #{tpu_custom_call.1} parent=0
    #allocation2 [shape = 'u8[4096]{0}', space=vmem, size = 0x1000, scoped, tag = 'input window, operand 0, single buffered']
    #allocation3 [shape = 's32[1]{0}', space=sflag, size = 0x4, scoped, tag = 'scoped memory for tpu_custom_call.1']
    #allocation4 [shape = 's32[1]{0}', space=sflag, size = 0x4, scoped, tag = 'scoped memory for tpu_custom_call.1']
    #allocation5 [shape = 'u8[4096]{0}', space=vmem, size = 0x1000, scoped, tag = 'input window, operand 1, single buffered']
    #allocation6 [shape = 's32[1]{0}', space=sflag, size = 0x4, scoped, tag = 'scoped memory for tpu_custom_call.1']
    #allocation7 [shape = 'u8[512]{0}', space=smem, size = 0x200, scoped, tag = 'output window, operand 0, single buffered']
    %7 = vsyncpa [#allocation3], 0
    %8 = vsyncpa [#allocation6], 0
    %9 = vsyncpa [#allocation4], 0
    // Predicated region
    $region2: #{tpu_custom_call.1} parent=1 // pred_check
      _
    $region3: #{tpu_custom_call.1} parent=1 // pred_check_branch
      %11 = sbr.rel (0) target = $region5
    $region4: #{tpu_custom_call.1} parent=1 // pred_region
      %s13 = ssub.s32 128, 128
      %14 = vsyncadd [#allocation3], %s13
      %s16 = sshll.u32 [#allocation2], 4
      %s17 = int_to_ptr.vmem [resolvable:$true] %s16
      %19 = dma.hbm_to_vmem [thread:$0]  %s0, 128, %s17, [#allocation3]
    $region5: #{tpu_custom_call.1} parent=1 // pred_fallthru
      _
    // Predicated region
    $region6: #{tpu_custom_call.1} parent=1 // pred_check
      _
    $region7: #{tpu_custom_call.1} parent=1 // pred_check_branch
      %21 = sbr.rel (0) target = $region9
    $region8: #{tpu_custom_call.1} parent=1 // pred_region
      %s23 = ssub.s32 128, 128
      %24 = vsyncadd [#allocation6], %s23
      %s26 = sshll.u32 [#allocation5], 4
      %s27 = int_to_ptr.vmem [resolvable:$true] %s26
      %29 = dma.hbm_to_vmem [thread:$0]  %s1, 128, %s27, [#allocation6]
    $region9: #{tpu_custom_call.1} parent=1 // pred_fallthru
      _
    // Predicated region
    $region10: #{tpu_custom_call.1} parent=1 // pred_check
      _
    $region11: #{tpu_custom_call.1} parent=1 // pred_check_branch
      %31 = sbr.rel (0) target = $region13
    $region12: #{tpu_custom_call.1} parent=1 // pred_region
      %32 = dma.done [#allocation3], 128
    $region13: #{tpu_custom_call.1} parent=1 // pred_fallthru
      _
    // Predicated region
    $region14: #{tpu_custom_call.1} parent=1 // pred_check
      _
    $region15: #{tpu_custom_call.1} parent=1 // pred_check_branch
      %34 = sbr.rel (0) target = $region17
    $region16: #{tpu_custom_call.1} parent=1 // pred_region
      %35 = dma.done [#allocation6], 128
    $region17: #{tpu_custom_call.1} parent=1 // pred_fallthru
      _
    %s36 = smul.u32 0, 8
    %v37 = vld [vmem:[#allocation2] sm:$0xff]
    %v38 = vld [vmem:[#allocation5] sm:$0xff]
    %s39 = scalar_lea.vmem [#allocation2], %s36
    %v40 = vld [vmem:[%s39] sm:$0xff]
    %s41 = scalar_lea.vmem [#allocation5], %s36
    %v42 = vld [vmem:[%s41] sm:$0xff]
    %vm43 = vcmp.gt.f32.partialorder %v42, 0.0
    %v44 = vmax.f32 %v42, 1.1754944e-38
    %v45 = vlog2.pop %v44
    %v46 = vmul.f32 %v45, 0.6931472
    %v47 = vsub.f32 %v46, %v40
    %v48 = vmul.f32 %v42, %v47
    %v49 = vsel %vm43, %v48, 0.0
    %vm50 = vcmask 261120
    %v51 = vsel %vm50, %v49, 0.0
    %52 = vadd.xlane.f32.xlu0 %v51
    %v53 = vpop.xlane.xlu0 %52
    %v54 = vrot.slane %v53, 4
    %v55 = vadd.f32 %v53, %v54
    %v56 = vrot.slane %v55, 2
    %v57 = vadd.f32 %v55, %v56
    %v58 = vrot.slane %v57, 1
    %v59 = vadd.f32 %v57, %v58
    %s60 = vtos %v59
    %v62 = vsel %vm50, %v40, 0
    %v65 = vsel %vm50, %v37, 0
    %67 = vmatprep.subr.mxu0 0.0
    %68 = vmatpush1.xpose.msra.mxu0 0.0
    %69 = vmatprep.subr.mxu0 0.0
    %70 = vmatpush1.xpose.msra.mxu0 0.0
    %71 = vmatprep.subr.mxu0 0.0
    %72 = vmatpush1.xpose.msra.mxu0 0.0
    %73 = vmatprep.subr.mxu0 0.0
    %74 = vmatpush1.xpose.msra.mxu0 0.0
    %75 = vmatprep.subr.mxu0 0.0
    %76 = vmatpush1.xpose.msra.mxu0 0.0
    %77 = vmatprep.subr.mxu0 0.0
    %78 = vmatpush1.xpose.msra.mxu0 0.0
    %79 = vmatprep.subr.mxu0 0.0
    %80 = vmatpush1.xpose.msra.mxu0 0.0
    %81 = vmatprep.subr.mxu0 0.0
    %82 = vmatpush1.xpose.msra.mxu0 0.0
    %83 = vmatprep.subr.mxu0 0.0
    %84 = vmatpush1.xpose.msra.mxu0 0.0
    %85 = vmatprep.subr.mxu0 0.0
    %86 = vmatpush1.xpose.msra.mxu0 0.0
    %87 = vmatprep.subr.mxu0 0.0
    %88 = vmatpush1.xpose.msra.mxu0 0.0
    %89 = vmatprep.subr.mxu0 0.0
    %90 = vmatpush1.xpose.msra.mxu0 0.0
    %91 = vmatprep.subr.mxu0 0.0
    %92 = vmatpush1.xpose.msra.mxu0 0.0
    %93 = vmatprep.subr.mxu0 0.0
    %94 = vmatpush1.xpose.msra.mxu0 0.0
    %95 = vmatprep.subr.mxu0 0.0
    %96 = vmatpush1.xpose.msra.mxu0 0.0
    %97 = vmatprep.subr.mxu0 0.0
    %98 = vmatpush1.xpose.msra.mxu0 %v65
    %99 = vmatprep.subr.mxu0 0.0
    %100 = vmatpush2.xpose.msra.mxu0 0.0
    %101 = vmatprep.subr.mxu0 0.0
    %102 = vmatpush2.xpose.msra.mxu0 0.0
    %103 = vmatprep.subr.mxu0 0.0
    %104 = vmatpush2.xpose.msra.mxu0 0.0
    %105 = vmatprep.subr.mxu0 0.0
    %106 = vmatpush2.xpose.msra.mxu0 0.0
    %107 = vmatprep.subr.mxu0 0.0
    %108 = vmatpush2.xpose.msra.mxu0 0.0
    %109 = vmatprep.subr.mxu0 0.0
    %110 = vmatpush2.xpose.msra.mxu0 0.0
    %111 = vmatprep.subr.mxu0 0.0
    %112 = vmatpush2.xpose.msra.mxu0 0.0
    %113 = vmatprep.subr.mxu0 0.0
    %114 = vmatpush2.xpose.msra.mxu0 0.0
    %115 = vmatprep.subr.mxu0 0.0
    %116 = vmatpush2.xpose.msra.mxu0 0.0
    %117 = vmatprep.subr.mxu0 0.0
    %118 = vmatpush2.xpose.msra.mxu0 0.0
    %119 = vmatprep.subr.mxu0 0.0
    %120 = vmatpush2.xpose.msra.mxu0 0.0
    %121 = vmatprep.subr.mxu0 0.0
    %122 = vmatpush2.xpose.msra.mxu0 0.0
    %123 = vmatprep.subr.mxu0 0.0
    %124 = vmatpush2.xpose.msra.mxu0 0.0
    %125 = vmatprep.subr.mxu0 0.0
    %126 = vmatpush2.xpose.msra.mxu0 0.0
    %127 = vmatprep.subr.mxu0 0.0
    %128 = vmatpush2.xpose.msra.mxu0 0.0
    %129 = vmatprep.subr.mxu0 0.0
    %130 = vmatpush2.xpose.msra.mxu0 0.0
    %131 = vmatprep.mubr.f32.mxu0 0.0
    %132 = vmatmul.mubr.f32.gmra.mxu0 %v62
    %v133 = vpop.f32.mrf.mxu0
    %v134 = vadd.f32 0.0, %v133
    %v135 = vpop.f32.mrf.mxu0
    %136 = vdwg.mxu0
    %v138 = vsel %vm50, %v42, 0
    %v141 = vsel %vm50, %v38, 0
    %143 = vmatprep.subr.mxu0 0.0
    %144 = vmatpush1.xpose.msra.mxu0 0.0
    %145 = vmatprep.subr.mxu0 0.0
    %146 = vmatpush1.xpose.msra.mxu0 0.0
    %147 = vmatprep.subr.mxu0 0.0
    %148 = vmatpush1.xpose.msra.mxu0 0.0
    %149 = vmatprep.subr.mxu0 0.0
    %150 = vmatpush1.xpose.msra.mxu0 0.0
    %151 = vmatprep.subr.mxu0 0.0
    %152 = vmatpush1.xpose.msra.mxu0 0.0
    %153 = vmatprep.subr.mxu0 0.0
    %154 = vmatpush1.xpose.msra.mxu0 0.0
    %155 = vmatprep.subr.mxu0 0.0
    %156 = vmatpush1.xpose.msra.mxu0 0.0
    %157 = vmatprep.subr.mxu0 0.0
    %158 = vmatpush1.xpose.msra.mxu0 0.0
    %159 = vmatprep.subr.mxu0 0.0
    %160 = vmatpush1.xpose.msra.mxu0 0.0
    %161 = vmatprep.subr.mxu0 0.0
    %162 = vmatpush1.xpose.msra.mxu0 0.0
    %163 = vmatprep.subr.mxu0 0.0
    %164 = vmatpush1.xpose.msra.mxu0 0.0
    %165 = vmatprep.subr.mxu0 0.0
    %166 = vmatpush1.xpose.msra.mxu0 0.0
    %167 = vmatprep.subr.mxu0 0.0
    %168 = vmatpush1.xpose.msra.mxu0 0.0
    %169 = vmatprep.subr.mxu0 0.0
    %170 = vmatpush1.xpose.msra.mxu0 0.0
    %171 = vmatprep.subr.mxu0 0.0
    %172 = vmatpush1.xpose.msra.mxu0 0.0
    %173 = vmatprep.subr.mxu0 0.0
    %174 = vmatpush1.xpose.msra.mxu0 %v141
    %175 = vmatprep.subr.mxu0 0.0
    %176 = vmatpush2.xpose.msra.mxu0 0.0
    %177 = vmatprep.subr.mxu0 0.0
    %178 = vmatpush2.xpose.msra.mxu0 0.0
    %179 = vmatprep.subr.mxu0 0.0
    %180 = vmatpush2.xpose.msra.mxu0 0.0
    %181 = vmatprep.subr.mxu0 0.0
    %182 = vmatpush2.xpose.msra.mxu0 0.0
    %183 = vmatprep.subr.mxu0 0.0
    %184 = vmatpush2.xpose.msra.mxu0 0.0
    %185 = vmatprep.subr.mxu0 0.0
    %186 = vmatpush2.xpose.msra.mxu0 0.0
    %187 = vmatprep.subr.mxu0 0.0
    %188 = vmatpush2.xpose.msra.mxu0 0.0
    %189 = vmatprep.subr.mxu0 0.0
    %190 = vmatpush2.xpose.msra.mxu0 0.0
    %191 = vmatprep.subr.mxu0 0.0
    %192 = vmatpush2.xpose.msra.mxu0 0.0
    %193 = vmatprep.subr.mxu0 0.0
    %194 = vmatpush2.xpose.msra.mxu0 0.0
    %195 = vmatprep.subr.mxu0 0.0
    %196 = vmatpush2.xpose.msra.mxu0 0.0
    %197 = vmatprep.subr.mxu0 0.0
    %198 = vmatpush2.xpose.msra.mxu0 0.0
    %199 = vmatprep.subr.mxu0 0.0
    %200 = vmatpush2.xpose.msra.mxu0 0.0
    %201 = vmatprep.subr.mxu0 0.0
    %202 = vmatpush2.xpose.msra.mxu0 0.0
    %203 = vmatprep.subr.mxu0 0.0
    %204 = vmatpush2.xpose.msra.mxu0 0.0
    %205 = vmatprep.subr.mxu0 0.0
    %206 = vmatpush2.xpose.msra.mxu0 0.0
    %207 = vmatprep.mubr.f32.mxu0 0.0
    %208 = vmatmul.mubr.f32.gmra.mxu0 %v138
    %v209 = vpop.f32.mrf.mxu0
    %v210 = vadd.f32 0.0, %v209
    %v211 = vpop.f32.mrf.mxu0
    %212 = vdwg.mxu0
    %vm213 = vcmask 64512
    %v214 = vsel %vm213, %v134, -inf
    %215 = vmax.xlane.f32.xlu0 %v214
    %v216 = vpop.xlane.xlu0 %215
    %v217 = vsel %vm213, %v210, -inf
    %218 = vmax.xlane.f32.xlu0 %v217
    %v219 = vpop.xlane.xlu0 %218
    %v220 = vsub.f32 %v134, %v216
    %v221 = vsub.f32 %v210, %v219
    %v222 = vmul.f32 %v220, 1.442695
    %v223 = vpow.pop %v222
    %v224 = vmul.f32 %v221, 1.442695
    %v225 = vpow.pop %v224
    %v226 = vsel %vm213, %v223, 0.0
    %227 = vadd.xlane.f32.xlu0 %v226
    %v228 = vpop.xlane.xlu0 %227
    %v229 = vsel %vm213, %v225, 0.0
    %230 = vadd.xlane.f32.xlu0 %v229
    %v231 = vpop.xlane.xlu0 %230
    %v232 = vrcp.pop %v228
    %v233 = vrcp.pop %v231
    %v234 = vmul.f32 %v223, %v232
    %v235 = vmul.f32 %v225, %v233
    %v237 = vsel %vm213, %v234, 0
    %239 = vmatprep.subr.mxu0 0.0
    %240 = vmatpush1.msra.mxu0 0.0
    %241 = vmatprep.subr.mxu0 0.0
    %242 = vmatpush1.msra.mxu0 0.0
    %243 = vmatprep.subr.mxu0 0.0
    %244 = vmatpush1.msra.mxu0 0.0
    %245 = vmatprep.subr.mxu0 0.0
    %246 = vmatpush1.msra.mxu0 0.0
    %247 = vmatprep.subr.mxu0 0.0
    %248 = vmatpush1.msra.mxu0 0.0
    %249 = vmatprep.subr.mxu0 0.0
    %250 = vmatpush1.msra.mxu0 0.0
    %251 = vmatprep.subr.mxu0 0.0
    %252 = vmatpush1.msra.mxu0 0.0
    %253 = vmatprep.subr.mxu0 0.0
    %254 = vmatpush1.msra.mxu0 0.0
    %255 = vmatprep.subr.mxu0 0.0
    %256 = vmatpush1.msra.mxu0 0.0
    %257 = vmatprep.subr.mxu0 0.0
    %258 = vmatpush1.msra.mxu0 0.0
    %259 = vmatprep.subr.mxu0 0.0
    %260 = vmatpush1.msra.mxu0 0.0
    %261 = vmatprep.subr.mxu0 0.0
    %262 = vmatpush1.msra.mxu0 0.0
    %263 = vmatprep.subr.mxu0 0.0
    %264 = vmatpush1.msra.mxu0 0.0
    %265 = vmatprep.subr.mxu0 0.0
    %266 = vmatpush1.msra.mxu0 0.0
    %267 = vmatprep.subr.mxu0 0.0
    %268 = vmatpush1.msra.mxu0 0.0
    %269 = vmatprep.subr.mxu0 0.0
    %270 = vmatpush1.msra.mxu0 %v37
    %271 = vmatprep.subr.mxu0 0.0
    %272 = vmatpush2.msra.mxu0 0.0
    %273 = vmatprep.subr.mxu0 0.0
    %274 = vmatpush2.msra.mxu0 0.0
    %275 = vmatprep.subr.mxu0 0.0
    %276 = vmatpush2.msra.mxu0 0.0
    %277 = vmatprep.subr.mxu0 0.0
    %278 = vmatpush2.msra.mxu0 0.0
    %279 = vmatprep.subr.mxu0 0.0
    %280 = vmatpush2.msra.mxu0 0.0
    %281 = vmatprep.subr.mxu0 0.0
    %282 = vmatpush2.msra.mxu0 0.0
    %283 = vmatprep.subr.mxu0 0.0
    %284 = vmatpush2.msra.mxu0 0.0
    %285 = vmatprep.subr.mxu0 0.0
    %286 = vmatpush2.msra.mxu0 0.0
    %287 = vmatprep.subr.mxu0 0.0
    %288 = vmatpush2.msra.mxu0 0.0
    %289 = vmatprep.subr.mxu0 0.0
    %290 = vmatpush2.msra.mxu0 0.0
    %291 = vmatprep.subr.mxu0 0.0
    %292 = vmatpush2.msra.mxu0 0.0
    %293 = vmatprep.subr.mxu0 0.0
    %294 = vmatpush2.msra.mxu0 0.0
    %295 = vmatprep.subr.mxu0 0.0
    %296 = vmatpush2.msra.mxu0 0.0
    %297 = vmatprep.subr.mxu0 0.0
    %298 = vmatpush2.msra.mxu0 0.0
    %299 = vmatprep.subr.mxu0 0.0
    %300 = vmatpush2.msra.mxu0 0.0
    %301 = vmatprep.subr.mxu0 0.0
    %302 = vmatpush2.msra.mxu0 0.0
    %303 = vmatprep.mubr.f32.mxu0 0.0
    %304 = vmatmul.mubr.f32.gmra.mxu0 %v237
    %v305 = vpop.f32.mrf.mxu0
    %v306 = vadd.f32 0.0, %v305
    %v307 = vpop.f32.mrf.mxu0
    %308 = vdwg.mxu0
    %v310 = vsel %vm213, %v235, 0
    %312 = vmatprep.subr.mxu0 0.0
    %313 = vmatpush1.msra.mxu0 0.0
    %314 = vmatprep.subr.mxu0 0.0
    %315 = vmatpush1.msra.mxu0 0.0
    %316 = vmatprep.subr.mxu0 0.0
    %317 = vmatpush1.msra.mxu0 0.0
    %318 = vmatprep.subr.mxu0 0.0
    %319 = vmatpush1.msra.mxu0 0.0
    %320 = vmatprep.subr.mxu0 0.0
    %321 = vmatpush1.msra.mxu0 0.0
    %322 = vmatprep.subr.mxu0 0.0
    %323 = vmatpush1.msra.mxu0 0.0
    %324 = vmatprep.subr.mxu0 0.0
    %325 = vmatpush1.msra.mxu0 0.0
    %326 = vmatprep.subr.mxu0 0.0
    %327 = vmatpush1.msra.mxu0 0.0
    %328 = vmatprep.subr.mxu0 0.0
    %329 = vmatpush1.msra.mxu0 0.0
    %330 = vmatprep.subr.mxu0 0.0
    %331 = vmatpush1.msra.mxu0 0.0
    %332 = vmatprep.subr.mxu0 0.0
    %333 = vmatpush1.msra.mxu0 0.0
    %334 = vmatprep.subr.mxu0 0.0
    %335 = vmatpush1.msra.mxu0 0.0
    %336 = vmatprep.subr.mxu0 0.0
    %337 = vmatpush1.msra.mxu0 0.0
    %338 = vmatprep.subr.mxu0 0.0
    %339 = vmatpush1.msra.mxu0 0.0
    %340 = vmatprep.subr.mxu0 0.0
    %341 = vmatpush1.msra.mxu0 0.0
    %342 = vmatprep.subr.mxu0 0.0
    %343 = vmatpush1.msra.mxu0 %v38
    %344 = vmatprep.subr.mxu0 0.0
    %345 = vmatpush2.msra.mxu0 0.0
    %346 = vmatprep.subr.mxu0 0.0
    %347 = vmatpush2.msra.mxu0 0.0
    %348 = vmatprep.subr.mxu0 0.0
    %349 = vmatpush2.msra.mxu0 0.0
    %350 = vmatprep.subr.mxu0 0.0
    %351 = vmatpush2.msra.mxu0 0.0
    %352 = vmatprep.subr.mxu0 0.0
    %353 = vmatpush2.msra.mxu0 0.0
    %354 = vmatprep.subr.mxu0 0.0
    %355 = vmatpush2.msra.mxu0 0.0
    %356 = vmatprep.subr.mxu0 0.0
    %357 = vmatpush2.msra.mxu0 0.0
    %358 = vmatprep.subr.mxu0 0.0
    %359 = vmatpush2.msra.mxu0 0.0
    %360 = vmatprep.subr.mxu0 0.0
    %361 = vmatpush2.msra.mxu0 0.0
    %362 = vmatprep.subr.mxu0 0.0
    %363 = vmatpush2.msra.mxu0 0.0
    %364 = vmatprep.subr.mxu0 0.0
    %365 = vmatpush2.msra.mxu0 0.0
    %366 = vmatprep.subr.mxu0 0.0
    %367 = vmatpush2.msra.mxu0 0.0
    %368 = vmatprep.subr.mxu0 0.0
    %369 = vmatpush2.msra.mxu0 0.0
    %370 = vmatprep.subr.mxu0 0.0
    %371 = vmatpush2.msra.mxu0 0.0
    %372 = vmatprep.subr.mxu0 0.0
    %373 = vmatpush2.msra.mxu0 0.0
    %374 = vmatprep.subr.mxu0 0.0
    %375 = vmatpush2.msra.mxu0 0.0
    %376 = vmatprep.mubr.f32.mxu0 0.0
    %377 = vmatmul.mubr.f32.gmra.mxu0 %v310
    %v378 = vpop.f32.mrf.mxu0
    %v379 = vadd.f32 0.0, %v378
    %v380 = vpop.f32.mrf.mxu0
    %381 = vdwg.mxu0
    %v382 = vsub.f32 %v306, %v379
    %v383 = vmul.f32 %v382, %v382
    %v384 = vsel %vm50, %v383, 0.0
    %385 = vadd.xlane.f32.xlu0 %v384
    %v386 = vpop.xlane.xlu0 %385
    %v387 = vrot.slane %v386, 4
    %v388 = vadd.f32 %v386, %v387
    %v389 = vrot.slane %v388, 2
    %v390 = vadd.f32 %v388, %v389
    %v391 = vrot.slane %v390, 1
    %v392 = vadd.f32 %v390, %v391
    %s393 = vtos %v392
    %s394 = sadd.f32 %s60, %s393
    %s395 = scalar_lea.smem [#allocation7], 0
    %396 = sst [smem:[%s395]] %s394
    // Predicated region
    $region18: #{tpu_custom_call.1} parent=1 // pred_check
      _
    $region19: #{tpu_custom_call.1} parent=1 // pred_check_branch
      %398 = sbr.rel (0) target = $region21
    $region20: #{tpu_custom_call.1} parent=1 // pred_region
      %s400 = ssub.s32 16, 16
      %401 = vsyncadd [#allocation4], %s400
      %404 = dma.smem_to_hbm [#allocation7], 16, %s2, [#allocation4]
    $region21: #{tpu_custom_call.1} parent=1 // pred_fallthru
      _
    // Predicated region
    $region22: #{tpu_custom_call.1} parent=1 // pred_check
      _
    $region23: #{tpu_custom_call.1} parent=1 // pred_check_branch
      %406 = sbr.rel (0) target = $region25
    $region24: #{tpu_custom_call.1} parent=1 // pred_region
      %407 = dma.done [#allocation4], 16
    $region25: #{tpu_custom_call.1} parent=1 // pred_fallthru
      _
    %408 = sfence
    %409 = vsyncpa [#allocation3], 1
    %410 = vsyncpa [#allocation6], 1
    %411 = vsyncpa [#allocation4], 1

</llo_original>
